<compile_context>
chip_gen: v5e
topology: v5e:2x2
jax: 0.10.0
libtpu: 0.0.40
codegen_flags: <defaults>
</compile_context>

<pallas_src>
import jax
import jax.numpy as jnp
from jax.experimental import pallas as pl
from jax.experimental.pallas import tpu as pltpu

LANE = 128
SUBLANE = 8


def _round_up(x, m):
    return (x + m - 1) // m * m


def make_mlp_kernel(n_inputs, n_hidden_layers):
    """Ref order: x_0..x_{n-1}, w1_0..w1_{n-1}, b1,
    (w_h, b_h) for hidden layers 1..L-1, wo, bo, o_ref."""

    def kernel(*refs):
        idx = 0
        x_refs = refs[idx:idx + n_inputs]; idx += n_inputs
        w1_refs = refs[idx:idx + n_inputs]; idx += n_inputs
        b1_ref = refs[idx]; idx += 1
        hidden = []
        for _ in range(n_hidden_layers - 1):
            hidden.append((refs[idx], refs[idx + 1])); idx += 2
        wo_ref, bo_ref, o_ref = refs[idx], refs[idx + 1], refs[idx + 2]

        # layer 0: fused concat -> sum of partial matmuls over input pieces.
        acc = b1_ref[...]                                    # (1, Hpad) f32
        for x_ref, w_ref in zip(x_refs, w1_refs):
            acc = acc + jnp.dot(x_ref[...], w_ref[...],
                                preferred_element_type=jnp.float32)
        h = jnp.tanh(acc)                                    # f32 tanh (EUP)

        # remaining hidden layers
        for w_ref, b_ref in hidden:
            z = jnp.dot(h.astype(jnp.bfloat16), w_ref[...],
                        preferred_element_type=jnp.float32) + b_ref[...]
            h = jnp.tanh(z)

        # output layer (no activation), lane-dense padded store
        out = jnp.dot(h.astype(jnp.bfloat16), wo_ref[...],
                      preferred_element_type=jnp.float32) + bo_ref[...]
        o_ref[...] = out.astype(o_ref.dtype)

    return kernel


def mlp_forward(inputs, params, *, block_m=512):
    """inputs: tuple of (B, d_j) f32 arrays (the pieces that would be
    concatenated along dim=1).  params: see prepare_params()."""
    n_in = len(inputs)
    B = inputs[0].shape[0]
    out_dim = params["out_dim"]
    o_pad = params["bo"].shape[1]

    # batch tiling: pad B up to a multiple of the row tile
    tm = min(block_m, _round_up(B, SUBLANE))
    b_pad = _round_up(B, tm)
    xs = []
    for x in inputs:
        x = x.astype(jnp.bfloat16)
        if b_pad != B:
            x = jnp.pad(x, ((0, b_pad - B), (0, 0)))
        xs.append(x)

    grid = (b_pad // tm,)
    const_map = lambda i: (0, 0)

    in_specs = []
    operands = []
    for x in xs:                                   # tiled activations
        in_specs.append(pl.BlockSpec((tm, x.shape[1]), lambda i: (i, 0)))
        operands.append(x)
    for w in params["w1"]:                         # resident weights
        in_specs.append(pl.BlockSpec(w.shape, const_map)); operands.append(w)
    in_specs.append(pl.BlockSpec(params["b1"].shape, const_map))
    operands.append(params["b1"])
    for w, b in params["hidden"]:
        in_specs.append(pl.BlockSpec(w.shape, const_map)); operands.append(w)
        in_specs.append(pl.BlockSpec(b.shape, const_map)); operands.append(b)
    in_specs.append(pl.BlockSpec(params["wo"].shape, const_map))
    operands.append(params["wo"])
    in_specs.append(pl.BlockSpec(params["bo"].shape, const_map))
    operands.append(params["bo"])

    out_specs = pl.BlockSpec((tm, o_pad), lambda i: (i, 0))

    # explicit VMEM budget (v7x only has 64 MiB physical): double-buffered
    # tiles + resident weights + headroom, floored at the 32 MiB default.
    def nbytes(a):
        return a.size * a.dtype.itemsize
    tile_bytes = sum(tm * x.shape[1] * 2 for x in xs) + tm * o_pad * 4
    weight_bytes = sum(nbytes(op) for op in operands) - sum(nbytes(x) for x in xs)
    vmem_limit = int(max(32 << 20, 2 * (tile_bytes + weight_bytes) + (8 << 20)))

    kernel = make_mlp_kernel(n_in, 1 + len(params["hidden"]))
    out = pl.pallas_call(
        kernel,
        out_shape=jax.ShapeDtypeStruct((b_pad, o_pad), jnp.float32),
        grid=grid,
        in_specs=in_specs,
        out_specs=out_specs,
        compiler_params=pltpu.CompilerParams(
            dimension_semantics=("parallel",),
            vmem_limit_bytes=vmem_limit,
        ),
    )(*operands)
    return out[:B, :out_dim]


def init_params(key, input_dim, hidden_dim, num_layers, output_dim):
    """nn.Linear-style U(-1/sqrt(fan_in), 1/sqrt(fan_in)) init, f32, true shapes.
    Weights stored as (in, out) == W.T of the PyTorch (out, in) weight."""
    def linear(k, fan_in, fan_out):
        kw, kb = jax.random.split(k)
        bound = 1.0 / jnp.sqrt(jnp.float32(fan_in))
        w = jax.random.uniform(kw, (fan_in, fan_out), jnp.float32, -bound, bound)
        b = jax.random.uniform(kb, (fan_out,), jnp.float32, -bound, bound)
        return w, b

    keys = jax.random.split(key, num_layers + 1)
    layers = [linear(keys[0], input_dim, hidden_dim)]
    for l in range(1, num_layers):
        layers.append(linear(keys[l], hidden_dim, hidden_dim))
    out_layer = linear(keys[num_layers], hidden_dim, output_dim)
    return layers, out_layer


def prepare_params(layers, out_layer, input_splits):
    """Pad feature dims to multiples of 128 (lane-dense), split the first-layer
    weight by input piece (fused concat) and cast weights to bf16."""
    w1, b1 = layers[0]
    in_dim, H = w1.shape
    Hpad = _round_up(H, LANE)
    wo, bo = out_layer
    O = wo.shape[1]
    Opad = _round_up(O, LANE)

    def pad2(w, r, c):
        return jnp.pad(w, ((0, r - w.shape[0]), (0, c - w.shape[1])))

    w1p = pad2(w1, in_dim, Hpad).astype(jnp.bfloat16)
    w1_splits, off = [], 0
    for d in input_splits:
        w1_splits.append(w1p[off:off + d, :])
        off += d
    b1p = jnp.pad(b1, (0, Hpad - H)).reshape(1, Hpad).astype(jnp.float32)

    hidden = []
    for w, b in layers[1:]:
        hidden.append((pad2(w, Hpad, Hpad).astype(jnp.bfloat16),
                       jnp.pad(b, (0, Hpad - H)).reshape(1, Hpad).astype(jnp.float32)))

    wop = pad2(wo, Hpad, Opad).astype(jnp.bfloat16)
    bop = jnp.pad(bo, (0, Opad - O)).reshape(1, Opad).astype(jnp.float32)
    return {"w1": w1_splits, "b1": b1p, "hidden": hidden,
            "wo": wop, "bo": bop, "out_dim": O}


if __name__ == "__main__":
    # MLP(input_dim=4, hidden_dim=32, num_layers=2, output_dim=4, activation='tanh')
    batch, hidden_dim, num_layers, output_dim = 8, 32, 2, 4
    input_splits = (2, 2)                  # two inputs concatenated on dim=1
    input_dim = sum(input_splits)

    key = jax.random.PRNGKey(0)
    kp, ka, kb = jax.random.split(key, 3)
    layers, out_layer = init_params(kp, input_dim, hidden_dim, num_layers, output_dim)
    params = prepare_params(layers, out_layer, input_splits)

    x_a = jax.random.normal(ka, (batch, input_splits[0]), jnp.float32)
    x_b = jax.random.normal(kb, (batch, input_splits[1]), jnp.float32)

    out = mlp_forward((x_a, x_b), params)
    jax.block_until_ready(out)

    # plain-JAX f32 reference (unpadded params)
    x = jnp.concatenate((x_a, x_b), axis=1)
    h = x
    for w, b in layers:
        h = jnp.tanh(h @ w + b)
    ref = h @ out_layer[0] + out_layer[1]

    assert out.shape == (batch, output_dim)
    # bf16 operands with f32 accumulation -> looser tolerance than pure f32
    assert jnp.allclose(out, ref, atol=2e-2, rtol=2e-2)

    print("KERNEL_OK")
</pallas_src>

<mosaic_0001>
module attributes {stable_mosaic.version = 11 : i64} {
  func.func @kernel(%arg0: i32, %arg1: memref<8x2xbf16, #tpu.memory_space<vmem>>, %arg2: memref<8x2xbf16, #tpu.memory_space<vmem>>, %arg3: memref<2x128xbf16, #tpu.memory_space<vmem>>, %arg4: memref<2x128xbf16, #tpu.memory_space<vmem>>, %arg5: memref<1x128xf32, #tpu.memory_space<vmem>>, %arg6: memref<128x128xbf16, #tpu.memory_space<vmem>>, %arg7: memref<1x128xf32, #tpu.memory_space<vmem>>, %arg8: memref<128x128xbf16, #tpu.memory_space<vmem>>, %arg9: memref<1x128xf32, #tpu.memory_space<vmem>>, %arg10: memref<8x128xf32, #tpu.memory_space<vmem>>) attributes {dimension_semantics = [#tpu.dimension_semantics<parallel>], iteration_bounds = array<i64: 1>, scalar_prefetch = 0 : i64, scratch_operands = 0 : i64, tpu.core_type = #tpu.core_type<tc>, window_params = [{transform_indices = @transform_0, window_bounds = array<i64: 8, 2>}, {transform_indices = @transform_1, window_bounds = array<i64: 8, 2>}, {pipeline_mode = #tpu.pipeline_mode<synchronous>, transform_indices = @transform_2, window_bounds = array<i64: 2, 128>}, {pipeline_mode = #tpu.pipeline_mode<synchronous>, transform_indices = @transform_3, window_bounds = array<i64: 2, 128>}, {pipeline_mode = #tpu.pipeline_mode<synchronous>, transform_indices = @transform_4, window_bounds = array<i64: 1, 128>}, {pipeline_mode = #tpu.pipeline_mode<synchronous>, transform_indices = @transform_5, window_bounds = array<i64: 128, 128>}, {pipeline_mode = #tpu.pipeline_mode<synchronous>, transform_indices = @transform_6, window_bounds = array<i64: 1, 128>}, {pipeline_mode = #tpu.pipeline_mode<synchronous>, transform_indices = @transform_7, window_bounds = array<i64: 128, 128>}, {pipeline_mode = #tpu.pipeline_mode<synchronous>, transform_indices = @transform_8, window_bounds = array<i64: 1, 128>}, {transform_indices = @transform_9, window_bounds = array<i64: 8, 128>}]} {
    %c0 = arith.constant 0 : index
    %c0_0 = arith.constant 0 : index
    %0 = vector.load %arg5[%c0, %c0_0] : memref<1x128xf32, #tpu.memory_space<vmem>>, vector<1x128xf32>
    %c0_1 = arith.constant 0 : index
    %c0_2 = arith.constant 0 : index
    %1 = vector.load %arg1[%c0_1, %c0_2] : memref<8x2xbf16, #tpu.memory_space<vmem>>, vector<8x2xbf16>
    %c0_3 = arith.constant 0 : index
    %c0_4 = arith.constant 0 : index
    %2 = vector.load %arg3[%c0_3, %c0_4] : memref<2x128xbf16, #tpu.memory_space<vmem>>, vector<2x128xbf16>
    %cst = arith.constant dense<0.000000e+00> : vector<8x128xf32>
    %3 = tpu.matmul %1, %2, %cst {dimension_numbers = #tpu.dot_dimension_numbers<[1], [0], [0], [1], [0, 0, 1, 1], [], []>} : vector<8x2xbf16>, vector<2x128xbf16>, vector<8x128xf32> -> vector<8x128xf32>
    %4 = vector.broadcast %0 : vector<1x128xf32> to vector<8x128xf32>
    %5 = arith.addf %4, %3 : vector<8x128xf32>
    %c0_5 = arith.constant 0 : index
    %c0_6 = arith.constant 0 : index
    %6 = vector.load %arg2[%c0_5, %c0_6] : memref<8x2xbf16, #tpu.memory_space<vmem>>, vector<8x2xbf16>
    %c0_7 = arith.constant 0 : index
    %c0_8 = arith.constant 0 : index
    %7 = vector.load %arg4[%c0_7, %c0_8] : memref<2x128xbf16, #tpu.memory_space<vmem>>, vector<2x128xbf16>
    %cst_9 = arith.constant dense<0.000000e+00> : vector<8x128xf32>
    %8 = tpu.matmul %6, %7, %cst_9 {dimension_numbers = #tpu.dot_dimension_numbers<[1], [0], [0], [1], [0, 0, 1, 1], [], []>} : vector<8x2xbf16>, vector<2x128xbf16>, vector<8x128xf32> -> vector<8x128xf32>
    %9 = arith.addf %5, %8 : vector<8x128xf32>
    %10 = math.tanh %9 : vector<8x128xf32>
    %11 = arith.truncf %10 : vector<8x128xf32> to vector<8x128xbf16>
    %c0_10 = arith.constant 0 : index
    %c0_11 = arith.constant 0 : index
    %12 = vector.load %arg6[%c0_10, %c0_11] : memref<128x128xbf16, #tpu.memory_space<vmem>>, vector<128x128xbf16>
    %cst_12 = arith.constant dense<0.000000e+00> : vector<8x128xf32>
    %13 = tpu.matmul %11, %12, %cst_12 {dimension_numbers = #tpu.dot_dimension_numbers<[1], [0], [0], [1], [0, 0, 1, 1], [], []>} : vector<8x128xbf16>, vector<128x128xbf16>, vector<8x128xf32> -> vector<8x128xf32>
    %c0_13 = arith.constant 0 : index
    %c0_14 = arith.constant 0 : index
    %14 = vector.load %arg7[%c0_13, %c0_14] : memref<1x128xf32, #tpu.memory_space<vmem>>, vector<1x128xf32>
    %15 = vector.broadcast %14 : vector<1x128xf32> to vector<8x128xf32>
    %16 = arith.addf %13, %15 : vector<8x128xf32>
    %17 = math.tanh %16 : vector<8x128xf32>
    %18 = arith.truncf %17 : vector<8x128xf32> to vector<8x128xbf16>
    %c0_15 = arith.constant 0 : index
    %c0_16 = arith.constant 0 : index
    %19 = vector.load %arg8[%c0_15, %c0_16] : memref<128x128xbf16, #tpu.memory_space<vmem>>, vector<128x128xbf16>
    %cst_17 = arith.constant dense<0.000000e+00> : vector<8x128xf32>
    %20 = tpu.matmul %18, %19, %cst_17 {dimension_numbers = #tpu.dot_dimension_numbers<[1], [0], [0], [1], [0, 0, 1, 1], [], []>} : vector<8x128xbf16>, vector<128x128xbf16>, vector<8x128xf32> -> vector<8x128xf32>
    %c0_18 = arith.constant 0 : index
    %c0_19 = arith.constant 0 : index
    %21 = vector.load %arg9[%c0_18, %c0_19] : memref<1x128xf32, #tpu.memory_space<vmem>>, vector<1x128xf32>
    %22 = vector.broadcast %21 : vector<1x128xf32> to vector<8x128xf32>
    %23 = arith.addf %20, %22 : vector<8x128xf32>
    %c0_20 = arith.constant 0 : index
    %c0_21 = arith.constant 0 : index
    %24 = vector.load %arg10[%c0_20, %c0_21] : memref<8x128xf32, #tpu.memory_space<vmem>>, vector<8x128xf32>
    tpu.vector_store %arg10[%c0_20, %c0_21], %23 {strides = array<i32>} : memref<8x128xf32, #tpu.memory_space<vmem>>, vector<8x128xf32>,
    return
  }
  func.func @transform_0(%arg0: i32) -> (i32, i32) {
    %c0_i32 = arith.constant 0 : i32
    %c0_i32_0 = arith.constant 0 : i32
    return %arg0, %c0_i32 : i32, i32
  }
  func.func @transform_1(%arg0: i32) -> (i32, i32) {
    %c0_i32 = arith.constant 0 : i32
    %c0_i32_0 = arith.constant 0 : i32
    return %arg0, %c0_i32 : i32, i32
  }
  func.func @transform_2(%arg0: i32) -> (i32, i32) {
    %c0_i32 = arith.constant 0 : i32
    %c0_i32_0 = arith.constant 0 : i32
    %c0_i32_1 = arith.constant 0 : i32
    return %c0_i32, %c0_i32_0 : i32, i32
  }
  func.func @transform_3(%arg0: i32) -> (i32, i32) {
    %c0_i32 = arith.constant 0 : i32
    %c0_i32_0 = arith.constant 0 : i32
    %c0_i32_1 = arith.constant 0 : i32
    return %c0_i32, %c0_i32_0 : i32, i32
  }
  func.func @transform_4(%arg0: i32) -> (i32, i32) {
    %c0_i32 = arith.constant 0 : i32
    %c0_i32_0 = arith.constant 0 : i32
    %c0_i32_1 = arith.constant 0 : i32
    return %c0_i32, %c0_i32_0 : i32, i32
  }
  func.func @transform_5(%arg0: i32) -> (i32, i32) {
    %c0_i32 = arith.constant 0 : i32
    %c0_i32_0 = arith.constant 0 : i32
    %c0_i32_1 = arith.constant 0 : i32
    return %c0_i32, %c0_i32_0 : i32, i32
  }
  func.func @transform_6(%arg0: i32) -> (i32, i32) {
    %c0_i32 = arith.constant 0 : i32
    %c0_i32_0 = arith.constant 0 : i32
    %c0_i32_1 = arith.constant 0 : i32
    return %c0_i32, %c0_i32_0 : i32, i32
  }
  func.func @transform_7(%arg0: i32) -> (i32, i32) {
    %c0_i32 = arith.constant 0 : i32
    %c0_i32_0 = arith.constant 0 : i32
    %c0_i32_1 = arith.constant 0 : i32
    return %c0_i32, %c0_i32_0 : i32, i32
  }
  func.func @transform_8(%arg0: i32) -> (i32, i32) {
    %c0_i32 = arith.constant 0 : i32
    %c0_i32_0 = arith.constant 0 : i32
    %c0_i32_1 = arith.constant 0 : i32
    return %c0_i32, %c0_i32_0 : i32, i32
  }
  func.func @transform_9(%arg0: i32) -> (i32, i32) {
    %c0_i32 = arith.constant 0 : i32
    %c0_i32_0 = arith.constant 0 : i32
    return %arg0, %c0_i32 : i32, i32
  }
}

</mosaic_0001>

<llo_original>
// kernel: tpu_custom_call.1
$region0: #{tpu_custom_call.1}
  #allocation0 [shape = 'u32[]', space=smem, size = 0x4, offset = 0x4, fixed_abs, tag = 'smem constant byte address 0x4 - core index']
  #allocation1 [shape = 'u32[72,128]{1,0:T(1,128)}', space=vmem, size = 0x9000, scoped, tag = 'internal scratch']
  %s0 = inlined_call_operand.vmem [shape: bf16[8,2], index: 0, kind: input, shape index: {}]
  %s1 = inlined_call_operand.vmem [shape: bf16[8,2], index: 1, kind: input, shape index: {}]
  %s2 = inlined_call_operand.vmem [shape: bf16[2,128], index: 2, kind: input, shape index: {}]
  %s3 = inlined_call_operand.vmem [shape: bf16[2,128], index: 3, kind: input, shape index: {}]
  %s4 = inlined_call_operand.vmem [shape: f32[1,128], index: 4, kind: input, shape index: {}]
  %s5 = inlined_call_operand.hbm [shape: bf16[128,128], index: 5, kind: input, shape index: {}]
  %s6 = inlined_call_operand.vmem [shape: f32[1,128], index: 6, kind: input, shape index: {}]
  %s7 = inlined_call_operand.hbm [shape: bf16[128,128], index: 7, kind: input, shape index: {}]
  %s8 = inlined_call_operand.vmem [shape: f32[1,128], index: 8, kind: input, shape index: {}]
  %s9 = inlined_call_operand.hbm [shape: f32[8,128], index: 9, kind: output, shape index: {}]
  %s10 = sld [smem:[#allocation0]]
  $region54: #{tpu_custom_call.1} parent=0
    _
  %s12 = ssub.s32 1, %s10
  %s13 = scalar_select 0, %s12, %s10
  $region1: #{tpu_custom_call.1} parent=0
    #allocation2 [shape = 'u8[32768]{0}', space=vmem, size = 0x8000, scoped, tag = 'input window, operand 5, single buffered']
    #allocation3 [shape = 's32[1]{0}', space=sflag, size = 0x4, scoped, tag = 'scoped memory for tpu_custom_call.1']
    #allocation4 [shape = 's32[1]{0}', space=sflag, size = 0x4, scoped, tag = 'scoped memory for tpu_custom_call.1']
    #allocation5 [shape = 'u8[32768]{0}', space=vmem, size = 0x8000, scoped, tag = 'input window, operand 7, single buffered']
    #allocation6 [shape = 's32[1]{0}', space=sflag, size = 0x4, scoped, tag = 'scoped memory for tpu_custom_call.1']
    #allocation7 [shape = 'u8[4096]{0}', space=vmem, size = 0x1000, scoped, tag = 'output window, operand 0, single buffered']
    %14 = vsyncpa [#allocation3], 0
    %15 = vsyncpa [#allocation6], 0
    %16 = vsyncpa [#allocation4], 0
    // Predicated region
    $region2: #{tpu_custom_call.1} parent=1 // pred_check
      _
    $region3: #{tpu_custom_call.1} parent=1 // pred_check_branch
      %18 = sbr.rel (0) target = $region5
    $region4: #{tpu_custom_call.1} parent=1 // pred_region
      _
    $region5: #{tpu_custom_call.1} parent=1 // pred_fallthru
      _
    // Predicated region
    $region6: #{tpu_custom_call.1} parent=1 // pred_check
      _
    $region7: #{tpu_custom_call.1} parent=1 // pred_check_branch
      %20 = sbr.rel (0) target = $region9
    $region8: #{tpu_custom_call.1} parent=1 // pred_region
      _
    $region9: #{tpu_custom_call.1} parent=1 // pred_fallthru
      _
    // Predicated region
    $region10: #{tpu_custom_call.1} parent=1 // pred_check
      _
    $region11: #{tpu_custom_call.1} parent=1 // pred_check_branch
      %22 = sbr.rel (0) target = $region13
    $region12: #{tpu_custom_call.1} parent=1 // pred_region
      _
    $region13: #{tpu_custom_call.1} parent=1 // pred_fallthru
      _
    // Predicated region
    $region14: #{tpu_custom_call.1} parent=1 // pred_check
      _
    $region15: #{tpu_custom_call.1} parent=1 // pred_check_branch
      %24 = sbr.rel (0) target = $region17
    $region16: #{tpu_custom_call.1} parent=1 // pred_region
      _
    $region17: #{tpu_custom_call.1} parent=1 // pred_fallthru
      _
    // Predicated region
    $region18: #{tpu_custom_call.1} parent=1 // pred_check
      _
    $region19: #{tpu_custom_call.1} parent=1 // pred_check_branch
      %26 = sbr.rel (0) target = $region21
    $region20: #{tpu_custom_call.1} parent=1 // pred_region
      _
    $region21: #{tpu_custom_call.1} parent=1 // pred_fallthru
      _
    // Predicated region
    $region22: #{tpu_custom_call.1} parent=1 // pred_check
      _
    $region23: #{tpu_custom_call.1} parent=1 // pred_check_branch
      %28 = sbr.rel (0) target = $region25
    $region24: #{tpu_custom_call.1} parent=1 // pred_region
      %30 = vsyncadd [#allocation3], 0
      %s31 = sshll.u32 %s5, 4
      %s32 = int_to_ptr.hbm [resolvable:$true] %s31
      %s33 = sshll.u32 [#allocation2], 4
      %s34 = int_to_ptr.vmem [resolvable:$true] %s33
      %39 = dma.hbm_to_vmem [thread:$0]  %s32, 1024, %s34, [#allocation3], 64, 64, 4
    $region25: #{tpu_custom_call.1} parent=1 // pred_fallthru
      _
    // Predicated region
    $region26: #{tpu_custom_call.1} parent=1 // pred_check
      _
    $region27: #{tpu_custom_call.1} parent=1 // pred_check_branch
      %41 = sbr.rel (0) target = $region29
    $region28: #{tpu_custom_call.1} parent=1 // pred_region
      _
    $region29: #{tpu_custom_call.1} parent=1 // pred_fallthru
      _
    // Predicated region
    $region30: #{tpu_custom_call.1} parent=1 // pred_check
      _
    $region31: #{tpu_custom_call.1} parent=1 // pred_check_branch
      %43 = sbr.rel (0) target = $region33
    $region32: #{tpu_custom_call.1} parent=1 // pred_region
      %45 = vsyncadd [#allocation6], 0
      %s46 = sshll.u32 %s7, 4
      %s47 = int_to_ptr.hbm [resolvable:$true] %s46
      %s48 = sshll.u32 [#allocation5], 4
      %s49 = int_to_ptr.vmem [resolvable:$true] %s48
      %54 = dma.hbm_to_vmem [thread:$0]  %s47, 1024, %s49, [#allocation6], 64, 64, 4
    $region33: #{tpu_custom_call.1} parent=1 // pred_fallthru
      _
    // Predicated region
    $region34: #{tpu_custom_call.1} parent=1 // pred_check
      _
    $region35: #{tpu_custom_call.1} parent=1 // pred_check_branch
      %56 = sbr.rel (0) target = $region37
    $region36: #{tpu_custom_call.1} parent=1 // pred_region
      _
    $region37: #{tpu_custom_call.1} parent=1 // pred_fallthru
      _
    // Predicated region
    $region38: #{tpu_custom_call.1} parent=1 // pred_check
      _
    $region39: #{tpu_custom_call.1} parent=1 // pred_check_branch
      %58 = sbr.rel (0) target = $region41
    $region40: #{tpu_custom_call.1} parent=1 // pred_region
      %60 = dma.done [#allocation3], 1024
    $region41: #{tpu_custom_call.1} parent=1 // pred_fallthru
      _
    // Predicated region
    $region42: #{tpu_custom_call.1} parent=1 // pred_check
      _
    $region43: #{tpu_custom_call.1} parent=1 // pred_check_branch
      %62 = sbr.rel (0) target = $region45
    $region44: #{tpu_custom_call.1} parent=1 // pred_region
      %64 = dma.done [#allocation6], 1024
    $region45: #{tpu_custom_call.1} parent=1 // pred_fallthru
      _
    %v66 = vld [vmem:[%s4] sm:$0x1]
    %v67 = vld [vmem:[%s0] sm:$0xf]
    %v68 = vld [vmem:[%s2] sm:$0x1]
    %vm69 = vcmask 15360
    %v71 = vsel %vm69, %v67, 0
    %vm73 = vcmask 1040384
    %v75 = vsel %vm73, %v68, 0
    %77 = vmatpush.bf16.msra.mxu0 0
    %78 = vmatpush.bf16.msra.mxu0 0
    %79 = vmatpush.bf16.msra.mxu0 0
    %80 = vmatpush.bf16.msra.mxu0 0
    %81 = vmatpush.bf16.msra.mxu0 0
    %82 = vmatpush.bf16.msra.mxu0 0
    %83 = vmatpush.bf16.msra.mxu0 0
    %84 = vmatpush.bf16.msra.mxu0 %v75
    %85 = vmatmul.bf16.gmra.mxu0 %v71
    %v86 = vpop.f32.mrf.mxu0
    %v87 = vadd.f32 0.0, %v86
    %v88 = vpop.f32.mrf.mxu0
    %89 = vdwg.mxu0
    %v91 = vperm.slane %v66, 0
    %v93 = vadd.f32 %v91, %v87
    %v94 = vld [vmem:[%s1] sm:$0xf]
    %v95 = vld [vmem:[%s3] sm:$0x1]
    %v97 = vsel %vm69, %v94, 0
    %v100 = vsel %vm73, %v95, 0
    %102 = vmatpush.bf16.msra.mxu0 0
    %103 = vmatpush.bf16.msra.mxu0 0
    %104 = vmatpush.bf16.msra.mxu0 0
    %105 = vmatpush.bf16.msra.mxu0 0
    %106 = vmatpush.bf16.msra.mxu0 0
    %107 = vmatpush.bf16.msra.mxu0 0
    %108 = vmatpush.bf16.msra.mxu0 0
    %109 = vmatpush.bf16.msra.mxu0 %v100
    %110 = vmatmul.bf16.gmra.mxu0 %v97
    %v111 = vpop.f32.mrf.mxu0
    %v112 = vadd.f32 0.0, %v111
    %v113 = vpop.f32.mrf.mxu0
    %114 = vdwg.mxu0
    %v115 = vadd.f32 %v93, %v112
    %v116 = vtanh.pop %v115
    %v117 = vpack.c.bf16 %v116, %v116
    %v118 = vld [vmem:[#allocation2] sm:$0xf]
    %v119 = vld [vmem:[#allocation2 + $0x4] sm:$0xf]
    %v120 = vld [vmem:[#allocation2 + $0x8] sm:$0xf]
    %v121 = vld [vmem:[#allocation2 + $0xc] sm:$0xf]
    %v122 = vld [vmem:[#allocation2 + $0x10] sm:$0xf]
    %v123 = vld [vmem:[#allocation2 + $0x14] sm:$0xf]
    %v124 = vld [vmem:[#allocation2 + $0x18] sm:$0xf]
    %v125 = vld [vmem:[#allocation2 + $0x1c] sm:$0xf]
    %v126 = vld [vmem:[#allocation2 + $0x20] sm:$0xf]
    %v127 = vld [vmem:[#allocation2 + $0x24] sm:$0xf]
    %v128 = vld [vmem:[#allocation2 + $0x28] sm:$0xf]
    %v129 = vld [vmem:[#allocation2 + $0x2c] sm:$0xf]
    %v130 = vld [vmem:[#allocation2 + $0x30] sm:$0xf]
    %v131 = vld [vmem:[#allocation2 + $0x34] sm:$0xf]
    %v132 = vld [vmem:[#allocation2 + $0x38] sm:$0xf]
    %v133 = vld [vmem:[#allocation2 + $0x3c] sm:$0xf]
    %v134 = vld [vmem:[%s6] sm:$0x1]
    %v136 = vperm.slane %v134, 0
    %v154 = vunpack.c.l.b16 %v118
    %v155 = vunpack.c.l.b16 %v119
    %v156 = vunpack.c.l.b16 %v120
    %v157 = vunpack.c.l.b16 %v121
    %v158 = vunpack.c.l.b16 %v122
    %v159 = vunpack.c.l.b16 %v123
    %v160 = vunpack.c.l.b16 %v124
    %v161 = vunpack.c.l.b16 %v125
    %v162 = vunpack.c.l.b16 %v126
    %v163 = vunpack.c.l.b16 %v127
    %v164 = vunpack.c.l.b16 %v128
    %v165 = vunpack.c.l.b16 %v129
    %v166 = vunpack.c.l.b16 %v130
    %v167 = vunpack.c.l.b16 %v131
    %v168 = vunpack.c.l.b16 %v132
    %v169 = vunpack.c.l.b16 %v133
    %v170 = vpack.c.b16 %v155, %v154
    %v171 = vpack.c.b16 %v157, %v156
    %v172 = vpack.c.b16 %v159, %v158
    %v173 = vpack.c.b16 %v161, %v160
    %v174 = vpack.c.b16 %v163, %v162
    %v175 = vpack.c.b16 %v165, %v164
    %v176 = vpack.c.b16 %v167, %v166
    %v177 = vpack.c.b16 %v169, %v168
    %186 = vmatpush.bf16.msra.mxu0 %v177
    %187 = vmatpush.bf16.msra.mxu0 %v176
    %188 = vmatpush.bf16.msra.mxu0 %v175
    %189 = vmatpush.bf16.msra.mxu0 %v174
    %190 = vmatpush.bf16.msra.mxu0 %v173
    %191 = vmatpush.bf16.msra.mxu0 %v172
    %192 = vmatpush.bf16.msra.mxu0 %v171
    %193 = vmatpush.bf16.msra.mxu0 %v170
    %194 = vmatmul.bf16.gmra.mxu0 %v117
    %v195 = vpop.f32.mrf.mxu0
    %v196 = vadd.f32 %v136, %v195
    %v197 = vpop.f32.mrf.mxu0
    %198 = vdwg.mxu0
    %v199 = vtanh.pop %v196
    %v200 = vpack.c.bf16 %v199, %v199
    %v201 = vld [vmem:[#allocation5] sm:$0xf]
    %v202 = vld [vmem:[#allocation5 + $0x4] sm:$0xf]
    %v203 = vld [vmem:[#allocation5 + $0x8] sm:$0xf]
    %v204 = vld [vmem:[#allocation5 + $0xc] sm:$0xf]
    %v205 = vld [vmem:[#allocation5 + $0x10] sm:$0xf]
    %v206 = vld [vmem:[#allocation5 + $0x14] sm:$0xf]
    %v207 = vld [vmem:[#allocation5 + $0x18] sm:$0xf]
    %v208 = vld [vmem:[#allocation5 + $0x1c] sm:$0xf]
    %v209 = vld [vmem:[#allocation5 + $0x20] sm:$0xf]
    %v210 = vld [vmem:[#allocation5 + $0x24] sm:$0xf]
    %v211 = vld [vmem:[#allocation5 + $0x28] sm:$0xf]
    %v212 = vld [vmem:[#allocation5 + $0x2c] sm:$0xf]
    %v213 = vld [vmem:[#allocation5 + $0x30] sm:$0xf]
    %v214 = vld [vmem:[#allocation5 + $0x34] sm:$0xf]
    %v215 = vld [vmem:[#allocation5 + $0x38] sm:$0xf]
    %v216 = vld [vmem:[#allocation5 + $0x3c] sm:$0xf]
    %v217 = vld [vmem:[%s8] sm:$0x1]
    %v219 = vperm.slane %v217, 0
    %v237 = vunpack.c.l.b16 %v201
    %v238 = vunpack.c.l.b16 %v202
    %v239 = vunpack.c.l.b16 %v203
    %v240 = vunpack.c.l.b16 %v204
    %v241 = vunpack.c.l.b16 %v205
    %v242 = vunpack.c.l.b16 %v206
    %v243 = vunpack.c.l.b16 %v207
    %v244 = vunpack.c.l.b16 %v208
    %v245 = vunpack.c.l.b16 %v209
    %v246 = vunpack.c.l.b16 %v210
    %v247 = vunpack.c.l.b16 %v211
    %v248 = vunpack.c.l.b16 %v212
    %v249 = vunpack.c.l.b16 %v213
    %v250 = vunpack.c.l.b16 %v214
    %v251 = vunpack.c.l.b16 %v215
    %v252 = vunpack.c.l.b16 %v216
    %v253 = vpack.c.b16 %v238, %v237
    %v254 = vpack.c.b16 %v240, %v239
    %v255 = vpack.c.b16 %v242, %v241
    %v256 = vpack.c.b16 %v244, %v243
    %v257 = vpack.c.b16 %v246, %v245
    %v258 = vpack.c.b16 %v248, %v247
    %v259 = vpack.c.b16 %v250, %v249
    %v260 = vpack.c.b16 %v252, %v251
    %269 = vmatpush.bf16.msra.mxu0 %v260
    %270 = vmatpush.bf16.msra.mxu0 %v259
    %271 = vmatpush.bf16.msra.mxu0 %v258
    %272 = vmatpush.bf16.msra.mxu0 %v257
    %273 = vmatpush.bf16.msra.mxu0 %v256
    %274 = vmatpush.bf16.msra.mxu0 %v255
    %275 = vmatpush.bf16.msra.mxu0 %v254
    %276 = vmatpush.bf16.msra.mxu0 %v253
    %277 = vmatmul.bf16.gmra.mxu0 %v200
    %v278 = vpop.f32.mrf.mxu0
    %v279 = vadd.f32 %v219, %v278
    %v280 = vpop.f32.mrf.mxu0
    %281 = vdwg.mxu0
    %282 = vst [vmem:[#allocation7] sm:$0xff] %v279
    // Predicated region
    $region46: #{tpu_custom_call.1} parent=1 // pred_check
      _
    $region47: #{tpu_custom_call.1} parent=1 // pred_check_branch
      %284 = sbr.rel (0) target = $region49
    $region48: #{tpu_custom_call.1} parent=1 // pred_region
      %286 = vsyncadd [#allocation4], 0
      %s288 = sshll.u32 [#allocation7], 4
      %s289 = int_to_ptr.vmem [resolvable:$true] %s288
      %s290 = sshll.u32 %s9, 4
      %s291 = int_to_ptr.hbm [resolvable:$true] %s290
      %293 = dma.vmem_to_hbm [thread:$0]  %s289, 128, %s291, [#allocation4]
    $region49: #{tpu_custom_call.1} parent=1 // pred_fallthru
      _
    // Predicated region
    $region50: #{tpu_custom_call.1} parent=1 // pred_check
      _
    $region51: #{tpu_custom_call.1} parent=1 // pred_check_branch
      %295 = sbr.rel (0) target = $region53
    $region52: #{tpu_custom_call.1} parent=1 // pred_region
      %297 = dma.done [#allocation4], 128
    $region53: #{tpu_custom_call.1} parent=1 // pred_fallthru
      _
    %298 = vsyncpa [#allocation3], 1
    %299 = vsyncpa [#allocation6], 1
    %300 = vsyncpa [#allocation4], 1

</llo_original>
